<compile_context>
chip_gen: v6e
topology: v6e:2x2x1
jax: 0.10.0
libtpu: 0.0.40
codegen_flags: <defaults>
</compile_context>

<pallas_src>
import functools

import jax
import jax.numpy as jnp
from jax.experimental import pallas as pl
from jax.experimental.pallas import tpu as pltpu

_LANES = 128
_SUBLANES = 8
_DEFAULT_TILE_ROWS = 8192                 # 8192*128*4B = 4 MiB / input / buffer
_VMEM_LIMIT_BYTES = 40 * 1024 * 1024


def _num_tensorcores_per_device():
    """Best-effort: 2 TCs on megacore-style chips (v4/v5p/v7x), else 1."""
    try:
        kind = jax.devices()[0].device_kind.lower()
    except Exception:  # pragma: no cover - perf heuristic only
        return 2
    single_tc = any(tag in kind for tag in ("lite", "v5e", "v6e", "v2", "v3"))
    return 1 if single_tc else 2


def _socnn_bulk_kernel(yt_ref, yp_ref, ys_ref, om_ref, oa_ref,
                       accm_ref, acca_ref, *,
                       tile_r, steps, rows_total, needs_mask):
    """Accumulate sum((yt-yp)^2) and sum((yt-ys)^2) over one core's tiles."""
    j = pl.program_id(1)

    @pl.when(j == 0)
    def _init():
        accm_ref[...] = jnp.zeros_like(accm_ref)
        acca_ref[...] = jnp.zeros_like(acca_ref)

    yt = yt_ref[...].astype(jnp.float32)
    dm = yt - yp_ref[...].astype(jnp.float32)
    da = yt - ys_ref[...].astype(jnp.float32)
    sq_m = dm * dm
    sq_a = da * da

    if needs_mask:
        # Global row index from the UN-clamped tile index; rows beyond the
        # valid range (partial last tile / clamped excess steps) contribute 0.
        t = pl.program_id(0) * steps + j
        row = t * tile_r + jax.lax.broadcasted_iota(
            jnp.int32, (tile_r, _LANES), 0)
        valid = row < rows_total
        sq_m = jnp.where(valid, sq_m, 0.0)
        sq_a = jnp.where(valid, sq_a, 0.0)

    # Tree-collapse the tile into compact (8, 128) accumulators: same VALU add
    # count as a full-tile accumulator, but no (tile_r, 128) scratch traffic.
    accm_ref[...] += sq_m.reshape(-1, _SUBLANES, _LANES).sum(axis=0)
    acca_ref[...] += sq_a.reshape(-1, _SUBLANES, _LANES).sum(axis=0)

    @pl.when(j == pl.num_programs(1) - 1)
    def _finalize():
        om_ref[...] = accm_ref[...]
        oa_ref[...] = acca_ref[...]


def socnn_loss(y_true, y_pred, y_sub, alpha=0.1, tile_rows=_DEFAULT_TILE_ROWS):
    """Pallas implementation of SOCNNLoss.forward."""
    assert y_true.shape == y_pred.shape == y_sub.shape
    n = y_true.size
    inv_n = 1.0 / float(n)

    yt = y_true.reshape(-1)
    yp = y_pred.reshape(-1)
    ys = y_sub.reshape(-1)

    rows_total = (n // _LANES)
    kernel_rows = rows_total if rows_total >= _SUBLANES else 0
    covered = kernel_rows * _LANES

    main_sum = jnp.float32(0.0)
    aux_sum = jnp.float32(0.0)

    if kernel_rows:
        def _slab(x):
            # Free reshape when n % 128 == 0 (covered == n); otherwise XLA
            # materializes the bulk slice (see TODO at top of file).
            return x[:covered].reshape(kernel_rows, _LANES)

        tile_r = max(_SUBLANES,
                     min((int(tile_rows) // _SUBLANES) * _SUBLANES,
                         (kernel_rows // _SUBLANES) * _SUBLANES))
        n_tiles = pl.cdiv(kernel_rows, tile_r)
        ncores = _num_tensorcores_per_device() if n_tiles >= 2 else 1
        steps = pl.cdiv(n_tiles, ncores)
        needs_mask = (ncores * steps * tile_r) != kernel_rows

        def in_index(c, j):
            # Clamp so trailing excess steps re-visit the last tile: the
            # pipeline skips the duplicate DMA (same block index) and the
            # in-kernel mask zeroes the contribution.
            return (jnp.minimum(c * steps + j, n_tiles - 1), 0)

        in_spec = pl.BlockSpec((tile_r, _LANES), in_index)
        out_spec = pl.BlockSpec((_SUBLANES, _LANES), lambda c, j: (c, 0))

        pm, pa = pl.pallas_call(
            functools.partial(_socnn_bulk_kernel, tile_r=tile_r, steps=steps,
                              rows_total=kernel_rows, needs_mask=needs_mask),
            out_shape=(
                jax.ShapeDtypeStruct((ncores * _SUBLANES, _LANES), jnp.float32),
                jax.ShapeDtypeStruct((ncores * _SUBLANES, _LANES), jnp.float32),
            ),
            grid_spec=pltpu.PrefetchScalarGridSpec(
                num_scalar_prefetch=0,
                grid=(ncores, steps),
                in_specs=[in_spec, in_spec, in_spec],
                out_specs=[out_spec, out_spec],
                scratch_shapes=[pltpu.VMEM((_SUBLANES, _LANES), jnp.float32),
                                pltpu.VMEM((_SUBLANES, _LANES), jnp.float32)],
            ),
            compiler_params=pltpu.CompilerParams(
                dimension_semantics=("parallel", "arbitrary"),
                vmem_limit_bytes=_VMEM_LIMIT_BYTES,
            ),
        )(_slab(yt), _slab(yp), _slab(ys))
        main_sum = jnp.sum(pm)
        aux_sum = jnp.sum(pa)

    # Ragged tail (< 128 elements, or everything when n < 1024): plain JAX.
    if covered < n:
        yt_t = yt[covered:].astype(jnp.float32)
        dm = yt_t - yp[covered:].astype(jnp.float32)
        da = yt_t - ys[covered:].astype(jnp.float32)
        main_sum = main_sum + jnp.sum(dm * dm)
        aux_sum = aux_sum + jnp.sum(da * da)

    # alpha applied outside the kernel -> no recompile per alpha value.
    return (main_sum + alpha * aux_sum) * inv_n


if __name__ == "__main__":
    key = jax.random.PRNGKey(0)

    def _ref(y_true, y_pred, y_sub, alpha):
        return (jnp.mean((y_true - y_pred) ** 2)
                + alpha * jnp.mean((y_true - y_sub) ** 2))

    # (shape, alpha, tile_rows) — small shapes; tile overrides exercise the
    # single-tile, exact multi-tile, clamped-excess-tile, and masked-ragged
    # code paths.
    cases = [
        ((2, 4, 16, 16), 0.1, _DEFAULT_TILE_ROWS),  # single tile
        ((4, 8, 32, 32), 0.25, 64),                 # multi-tile, exact cover
        ((4, 8, 32, 32), 0.1, 40),                  # odd tile count -> clamp+mask
        ((3, 5, 17, 17), 0.1, 16),                  # mask + <128-elem JAX tail
    ]

    for idx, (shape, alpha, tr) in enumerate(cases):
        k1, k2, k3 = jax.random.split(jax.random.fold_in(key, idx), 3)
        y_true = jax.random.normal(k1, shape, dtype=jnp.float32)
        y_pred = jax.random.normal(k2, shape, dtype=jnp.float32)
        y_sub = jax.random.normal(k3, shape, dtype=jnp.float32)

        loss = jax.block_until_ready(
            socnn_loss(y_true, y_pred, y_sub, alpha, tile_rows=tr))
        ref = _ref(y_true, y_pred, y_sub, alpha)
        assert jnp.allclose(loss, ref, rtol=1e-4, atol=1e-6), (shape, loss, ref)

    print("KERNEL_OK")
</pallas_src>

<mosaic_0001>
module attributes {stable_mosaic.version = 11 : i64} {
  func.func @_socnn_bulk_kernel(%arg0: i32, %arg1: i32, %arg2: memref<16x128xf32, #tpu.memory_space<vmem>>, %arg3: memref<16x128xf32, #tpu.memory_space<vmem>>, %arg4: memref<16x128xf32, #tpu.memory_space<vmem>>, %arg5: memref<8x128xf32, #tpu.memory_space<vmem>>, %arg6: memref<8x128xf32, #tpu.memory_space<vmem>>, %arg7: memref<8x128xf32, #tpu.memory_space<vmem>>, %arg8: memref<8x128xf32, #tpu.memory_space<vmem>>) attributes {dimension_semantics = [#tpu.dimension_semantics<parallel>, #tpu.dimension_semantics<arbitrary>], iteration_bounds = array<i64: 1, 1>, scalar_prefetch = 0 : i64, scratch_operands = 2 : i64, tpu.core_type = #tpu.core_type<tc>, window_params = [{transform_indices = @transform_0, window_bounds = array<i64: 16, 128>}, {transform_indices = @transform_1, window_bounds = array<i64: 16, 128>}, {transform_indices = @transform_2, window_bounds = array<i64: 16, 128>}, {transform_indices = @transform_3, window_bounds = array<i64: 8, 128>}, {transform_indices = @transform_4, window_bounds = array<i64: 8, 128>}]} {
    %c0_i32 = arith.constant 0 : i32
    %0 = arith.cmpi eq, %arg1, %c0_i32 : i32
    %1 = arith.extui %0 : i1 to i32
    %c0_i32_0 = arith.constant 0 : i32
    %2 = arith.cmpi ne, %1, %c0_i32_0 : i32
    scf.if %2 {
      %cst_17 = arith.constant 0.000000e+00 : f32
      %23 = vector.broadcast %cst_17 : f32 to vector<8x128xf32>
      %c0_18 = arith.constant 0 : index
      %c0_19 = arith.constant 0 : index
      %24 = vector.load %arg7[%c0_18, %c0_19] : memref<8x128xf32, #tpu.memory_space<vmem>>, vector<8x128xf32>
      tpu.vector_store %arg7[%c0_18, %c0_19], %23 {strides = array<i32>} : memref<8x128xf32, #tpu.memory_space<vmem>>, vector<8x128xf32>,
      %cst_20 = arith.constant 0.000000e+00 : f32
      %25 = vector.broadcast %cst_20 : f32 to vector<8x128xf32>
      %c0_21 = arith.constant 0 : index
      %c0_22 = arith.constant 0 : index
      %26 = vector.load %arg8[%c0_21, %c0_22] : memref<8x128xf32, #tpu.memory_space<vmem>>, vector<8x128xf32>
      tpu.vector_store %arg8[%c0_21, %c0_22], %25 {strides = array<i32>} : memref<8x128xf32, #tpu.memory_space<vmem>>, vector<8x128xf32>,
    } else {
    }
    %c0 = arith.constant 0 : index
    %c0_1 = arith.constant 0 : index
    %3 = vector.load %arg2[%c0, %c0_1] : memref<16x128xf32, #tpu.memory_space<vmem>>, vector<16x128xf32>
    %c0_2 = arith.constant 0 : index
    %c0_3 = arith.constant 0 : index
    %4 = vector.load %arg3[%c0_2, %c0_3] : memref<16x128xf32, #tpu.memory_space<vmem>>, vector<16x128xf32>
    %5 = arith.subf %3, %4 : vector<16x128xf32>
    %c0_4 = arith.constant 0 : index
    %c0_5 = arith.constant 0 : index
    %6 = vector.load %arg4[%c0_4, %c0_5] : memref<16x128xf32, #tpu.memory_space<vmem>>, vector<16x128xf32>
    %7 = arith.subf %3, %6 : vector<16x128xf32>
    %8 = arith.mulf %5, %5 : vector<16x128xf32>
    %9 = arith.mulf %7, %7 : vector<16x128xf32>
    %c0_6 = arith.constant 0 : index
    %c0_7 = arith.constant 0 : index
    %10 = vector.load %arg7[%c0_6, %c0_7] : memref<8x128xf32, #tpu.memory_space<vmem>>, vector<8x128xf32>
    %11 = vector.shape_cast %8 : vector<16x128xf32> to vector<2x8x128xf32>
    %cst = arith.constant dense<0.000000e+00> : vector<8x128xf32>
    %12 = vector.multi_reduction <add>, %11, %cst [0] : vector<2x8x128xf32> to vector<8x128xf32>
    %13 = arith.addf %10, %12 : vector<8x128xf32>
    %c0_8 = arith.constant 0 : index
    %c0_9 = arith.constant 0 : index
    %14 = vector.load %arg7[%c0_8, %c0_9] : memref<8x128xf32, #tpu.memory_space<vmem>>, vector<8x128xf32>
    tpu.vector_store %arg7[%c0_8, %c0_9], %13 {strides = array<i32>} : memref<8x128xf32, #tpu.memory_space<vmem>>, vector<8x128xf32>,
    %c0_10 = arith.constant 0 : index
    %c0_11 = arith.constant 0 : index
    %15 = vector.load %arg8[%c0_10, %c0_11] : memref<8x128xf32, #tpu.memory_space<vmem>>, vector<8x128xf32>
    %16 = vector.shape_cast %9 : vector<16x128xf32> to vector<2x8x128xf32>
    %cst_12 = arith.constant dense<0.000000e+00> : vector<8x128xf32>
    %17 = vector.multi_reduction <add>, %16, %cst_12 [0] : vector<2x8x128xf32> to vector<8x128xf32>
    %18 = arith.addf %15, %17 : vector<8x128xf32>
    %c0_13 = arith.constant 0 : index
    %c0_14 = arith.constant 0 : index
    %19 = vector.load %arg8[%c0_13, %c0_14] : memref<8x128xf32, #tpu.memory_space<vmem>>, vector<8x128xf32>
    tpu.vector_store %arg8[%c0_13, %c0_14], %18 {strides = array<i32>} : memref<8x128xf32, #tpu.memory_space<vmem>>, vector<8x128xf32>,
    %c0_i32_15 = arith.constant 0 : i32
    %20 = arith.cmpi eq, %arg1, %c0_i32_15 : i32
    %21 = arith.extui %20 : i1 to i32
    %c0_i32_16 = arith.constant 0 : i32
    %22 = arith.cmpi ne, %21, %c0_i32_16 : i32
    scf.if %22 {
      %c0_17 = arith.constant 0 : index
      %c0_18 = arith.constant 0 : index
      %23 = vector.load %arg7[%c0_17, %c0_18] : memref<8x128xf32, #tpu.memory_space<vmem>>, vector<8x128xf32>
      %c0_19 = arith.constant 0 : index
      %c0_20 = arith.constant 0 : index
      %24 = vector.load %arg5[%c0_19, %c0_20] : memref<8x128xf32, #tpu.memory_space<vmem>>, vector<8x128xf32>
      tpu.vector_store %arg5[%c0_19, %c0_20], %23 {strides = array<i32>} : memref<8x128xf32, #tpu.memory_space<vmem>>, vector<8x128xf32>,
      %c0_21 = arith.constant 0 : index
      %c0_22 = arith.constant 0 : index
      %25 = vector.load %arg8[%c0_21, %c0_22] : memref<8x128xf32, #tpu.memory_space<vmem>>, vector<8x128xf32>
      %c0_23 = arith.constant 0 : index
      %c0_24 = arith.constant 0 : index
      %26 = vector.load %arg6[%c0_23, %c0_24] : memref<8x128xf32, #tpu.memory_space<vmem>>, vector<8x128xf32>
      tpu.vector_store %arg6[%c0_23, %c0_24], %25 {strides = array<i32>} : memref<8x128xf32, #tpu.memory_space<vmem>>, vector<8x128xf32>,
    } else {
    }
    return
  }
  func.func @transform_0(%arg0: i32, %arg1: i32) -> (i32, i32) {
    %c1_i32 = arith.constant 1 : i32
    %0 = arith.muli %arg0, %c1_i32 : i32
    %1 = arith.addi %0, %arg1 : i32
    %c0_i32 = arith.constant 0 : i32
    %2 = arith.minsi %1, %c0_i32 : i32
    %c0_i32_0 = arith.constant 0 : i32
    %c0_i32_1 = arith.constant 0 : i32
    return %2, %c0_i32_0 : i32, i32
  }
  func.func @transform_1(%arg0: i32, %arg1: i32) -> (i32, i32) {
    %c1_i32 = arith.constant 1 : i32
    %0 = arith.muli %arg0, %c1_i32 : i32
    %1 = arith.addi %0, %arg1 : i32
    %c0_i32 = arith.constant 0 : i32
    %2 = arith.minsi %1, %c0_i32 : i32
    %c0_i32_0 = arith.constant 0 : i32
    %c0_i32_1 = arith.constant 0 : i32
    return %2, %c0_i32_0 : i32, i32
  }
  func.func @transform_2(%arg0: i32, %arg1: i32) -> (i32, i32) {
    %c1_i32 = arith.constant 1 : i32
    %0 = arith.muli %arg0, %c1_i32 : i32
    %1 = arith.addi %0, %arg1 : i32
    %c0_i32 = arith.constant 0 : i32
    %2 = arith.minsi %1, %c0_i32 : i32
    %c0_i32_0 = arith.constant 0 : i32
    %c0_i32_1 = arith.constant 0 : i32
    return %2, %c0_i32_0 : i32, i32
  }
  func.func @transform_3(%arg0: i32, %arg1: i32) -> (i32, i32) {
    %c0_i32 = arith.constant 0 : i32
    %c0_i32_0 = arith.constant 0 : i32
    return %arg0, %c0_i32 : i32, i32
  }
  func.func @transform_4(%arg0: i32, %arg1: i32) -> (i32, i32) {
    %c0_i32 = arith.constant 0 : i32
    %c0_i32_0 = arith.constant 0 : i32
    return %arg0, %c0_i32 : i32, i32
  }
}

</mosaic_0001>

<llo_original>
// kernel: tpu_custom_call.1
$region0: #{tpu_custom_call.1}
  #allocation0 [shape = 'u32[]', space=smem, size = 0x4, offset = 0x4, fixed_abs, tag = 'smem constant byte address 0x4 - core index']
  #allocation1 [shape = 'u32[144,128]{1,0:T(1,128)}', space=vmem, size = 0x12000, scoped, tag = 'internal scratch']
  #allocation2 [shape = 'f32[8,128]{1,0:T(8,128)}', space=vmem, size = 0x1000, scoped, tag = 'scratch operand']
  #allocation3 [shape = 'f32[8,128]{1,0:T(8,128)}', space=vmem, size = 0x1000, scoped, tag = 'scratch operand']
  %s0 = inlined_call_operand.hbm [shape: f32[16,128], index: 0, kind: input, shape index: {}]
  %s1 = inlined_call_operand.hbm [shape: f32[16,128], index: 1, kind: input, shape index: {}]
  %s2 = inlined_call_operand.hbm [shape: f32[16,128], index: 2, kind: input, shape index: {}]
  %s3 = inlined_call_operand.hbm [shape: f32[8,128], index: 3, kind: output, shape index: {0}]
  %s4 = inlined_call_operand.hbm [shape: f32[8,128], index: 4, kind: output, shape index: {1}]
  %5 = xla_tuple %s3, %s4
  %s6 = sld [smem:[#allocation0]]
  $region50: #{tpu_custom_call.1} parent=0
    _
  %s8 = ssub.s32 1, %s6
  %s9 = scalar_select 0, %s8, %s6
  $region1: #{tpu_custom_call.1} parent=0
    #allocation4 [shape = 'u8[8192]{0}', space=vmem, size = 0x2000, scoped, tag = 'input window, operand 0, single buffered']
    #allocation5 [shape = 's32[1]{0}', space=sflag, size = 0x4, scoped, tag = 'scoped memory for tpu_custom_call.1']
    #allocation6 [shape = 's32[1]{0}', space=sflag, size = 0x4, scoped, tag = 'scoped memory for tpu_custom_call.1']
    #allocation7 [shape = 'u8[8192]{0}', space=vmem, size = 0x2000, scoped, tag = 'input window, operand 1, single buffered']
    #allocation8 [shape = 's32[1]{0}', space=sflag, size = 0x4, scoped, tag = 'scoped memory for tpu_custom_call.1']
    #allocation9 [shape = 'u8[8192]{0}', space=vmem, size = 0x2000, scoped, tag = 'input window, operand 2, single buffered']
    #allocation10 [shape = 'u8[4096]{0}', space=vmem, size = 0x1000, scoped, tag = 'output window, operand 0, single buffered']
    #allocation11 [shape = 'u8[4096]{0}', space=vmem, size = 0x1000, scoped, tag = 'output window, operand 1, single buffered']
    #allocation12 [shape = 's32[1]{0}', space=sflag, size = 0x4, scoped, tag = 'scoped memory for tpu_custom_call.1']
    %10 = vsyncpa [#allocation5], 0
    %11 = vsyncpa [#allocation8], 0
    %12 = vsyncpa [#allocation6], 0
    %13 = vsyncpa [#allocation12], 0
    // Predicated region
    $region2: #{tpu_custom_call.1} parent=1 // pred_check
      _
    $region3: #{tpu_custom_call.1} parent=1 // pred_check_branch
      %15 = sbr.rel (0) target = $region5
    $region4: #{tpu_custom_call.1} parent=1 // pred_region
      %s16 = sadd.s32 0, 0
      %p17 = scmp.lt.s32.totalorder %s16, 0
      %s18 = scalar_select %p17, %s16, 0
      %s19 = smul.u32 2, %s18
      %s21 = ssub.s32 256, 256
      %22 = vsyncadd [#allocation5], %s21
      %s23 = smul.addr %s19, 128
      %s24 = scalar_lea.hbm %s0, %s23
      %s25 = sshll.u32 [#allocation4], 4
      %s26 = int_to_ptr.vmem [resolvable:$true] %s25
      %31 = dma.hbm_to_vmem [thread:$0]  %s24, 256, %s26, [#allocation5], 128, 128, 8
    $region5: #{tpu_custom_call.1} parent=1 // pred_fallthru
      _
    // Predicated region
    $region6: #{tpu_custom_call.1} parent=1 // pred_check
      _
    $region7: #{tpu_custom_call.1} parent=1 // pred_check_branch
      %33 = sbr.rel (0) target = $region9
    $region8: #{tpu_custom_call.1} parent=1 // pred_region
      %s34 = sadd.s32 0, 0
      %p35 = scmp.lt.s32.totalorder %s34, 0
      %s36 = scalar_select %p35, %s34, 0
      %s37 = smul.u32 2, %s36
      %s39 = ssub.s32 256, 256
      %40 = vsyncadd [#allocation8], %s39
      %s41 = smul.addr %s37, 128
      %s42 = scalar_lea.hbm %s1, %s41
      %s43 = sshll.u32 [#allocation7], 4
      %s44 = int_to_ptr.vmem [resolvable:$true] %s43
      %49 = dma.hbm_to_vmem [thread:$0]  %s42, 256, %s44, [#allocation8], 128, 128, 8
    $region9: #{tpu_custom_call.1} parent=1 // pred_fallthru
      _
    // Predicated region
    $region10: #{tpu_custom_call.1} parent=1 // pred_check
      _
    $region11: #{tpu_custom_call.1} parent=1 // pred_check_branch
      %51 = sbr.rel (0) target = $region13
    $region12: #{tpu_custom_call.1} parent=1 // pred_region
      %s52 = sadd.s32 0, 0
      %p53 = scmp.lt.s32.totalorder %s52, 0
      %s54 = scalar_select %p53, %s52, 0
      %s55 = smul.u32 2, %s54
      %s57 = ssub.s32 256, 256
      %58 = vsyncadd [#allocation8], %s57
      %s59 = smul.addr %s55, 128
      %s60 = scalar_lea.hbm %s2, %s59
      %s61 = sshll.u32 [#allocation9], 4
      %s62 = int_to_ptr.vmem [resolvable:$true] %s61
      %67 = dma.hbm_to_vmem [thread:$0]  %s60, 256, %s62, [#allocation8], 128, 128, 8
    $region13: #{tpu_custom_call.1} parent=1 // pred_fallthru
      _
    // Predicated region
    $region14: #{tpu_custom_call.1} parent=1 // pred_check
      _
    $region15: #{tpu_custom_call.1} parent=1 // pred_check_branch
      %69 = sbr.rel (0) target = $region17
    $region16: #{tpu_custom_call.1} parent=1 // pred_region
      %70 = dma.done [#allocation5], 256
    $region17: #{tpu_custom_call.1} parent=1 // pred_fallthru
      _
    // Predicated region
    $region18: #{tpu_custom_call.1} parent=1 // pred_check
      _
    $region19: #{tpu_custom_call.1} parent=1 // pred_check_branch
      %72 = sbr.rel (0) target = $region21
    $region20: #{tpu_custom_call.1} parent=1 // pred_region
      %73 = dma.done [#allocation8], 256
    $region21: #{tpu_custom_call.1} parent=1 // pred_fallthru
      _
    // Predicated region
    $region22: #{tpu_custom_call.1} parent=1 // pred_check
      _
    $region23: #{tpu_custom_call.1} parent=1 // pred_check_branch
      %75 = sbr.rel (0) target = $region25
    $region24: #{tpu_custom_call.1} parent=1 // pred_region
      %76 = dma.done [#allocation8], 256
    $region25: #{tpu_custom_call.1} parent=1 // pred_fallthru
      _
    %s77 = sadd.s32 0, 0
    %p78 = scmp.lt.s32.totalorder %s77, 0
    %s79 = scalar_select %p78, %s77, 0
    %s80 = smul.u32 2, %s79
    %s81 = sadd.s32 0, 0
    %p82 = scmp.lt.s32.totalorder %s81, 0
    %s83 = scalar_select %p82, %s81, 0
    %s84 = smul.u32 2, %s83
    %s85 = sadd.s32 0, 0
    %p86 = scmp.lt.s32.totalorder %s85, 0
    %s87 = scalar_select %p86, %s85, 0
    %s88 = smul.u32 2, %s87
    %p89 = scmp.eq.s32.totalorder 0, 0
    // Predicated region
    $region26: #{tpu_custom_call.1} parent=1 // pred_check
      %p90 = pneg %p89
    $region27: #{tpu_custom_call.1} parent=1 // pred_check_branch
      %92 = sbr.rel (%p90) target = $region29
    $region28: #{tpu_custom_call.1} parent=1 // pred_region
      %93 = vst [vmem:[#allocation2] sm:$0xff] 0.0
      %94 = vst [vmem:[#allocation3] sm:$0xff] 0.0
    $region29: #{tpu_custom_call.1} parent=1 // pred_fallthru
      _
    %v95 = vld [vmem:[#allocation4] sm:$0xff]
    %v96 = vld [vmem:[#allocation4 + $0x8] sm:$0xff]
    %v97 = vld [vmem:[#allocation7] sm:$0xff]
    %v98 = vld [vmem:[#allocation7 + $0x8] sm:$0xff]
    %v99 = vsub.f32 %v95, %v97
    %v100 = vsub.f32 %v96, %v98
    %v101 = vld [vmem:[#allocation9] sm:$0xff]
    %v102 = vld [vmem:[#allocation9 + $0x8] sm:$0xff]
    %v103 = vsub.f32 %v95, %v101
    %v104 = vsub.f32 %v96, %v102
    %v105 = vmul.f32 %v99, %v99
    %v106 = vmul.f32 %v100, %v100
    %v107 = vmul.f32 %v103, %v103
    %v108 = vmul.f32 %v104, %v104
    %v109 = vld [vmem:[#allocation2] sm:$0xff]
    %v110 = vadd.f32 %v105, %v106
    %v111 = vadd.f32 %v109, %v110
    %112 = vst [vmem:[#allocation2] sm:$0xff] %v111
    %v113 = vld [vmem:[#allocation3] sm:$0xff]
    %v114 = vadd.f32 %v107, %v108
    %v115 = vadd.f32 %v113, %v114
    %116 = vst [vmem:[#allocation3] sm:$0xff] %v115
    // Predicated region
    $region30: #{tpu_custom_call.1} parent=1 // pred_check
      %p117 = pneg %p89
    $region31: #{tpu_custom_call.1} parent=1 // pred_check_branch
      %119 = sbr.rel (%p117) target = $region33
    $region32: #{tpu_custom_call.1} parent=1 // pred_region
      %v120 = vld [vmem:[#allocation2] sm:$0xff]
      %121 = vst [vmem:[#allocation10] sm:$0xff] %v120
      %v122 = vld [vmem:[#allocation3] sm:$0xff]
      %123 = vst [vmem:[#allocation11] sm:$0xff] %v122
    $region33: #{tpu_custom_call.1} parent=1 // pred_fallthru
      _
    // Predicated region
    $region34: #{tpu_custom_call.1} parent=1 // pred_check
      _
    $region35: #{tpu_custom_call.1} parent=1 // pred_check_branch
      %125 = sbr.rel (0) target = $region37
    $region36: #{tpu_custom_call.1} parent=1 // pred_region
      %s127 = ssub.s32 128, 128
      %128 = vsyncadd [#allocation6], %s127
      %s130 = sshll.u32 [#allocation10], 4
      %s131 = int_to_ptr.vmem [resolvable:$true] %s130
      %133 = dma.vmem_to_hbm [thread:$0]  %s131, 128, %s3, [#allocation6]
    $region37: #{tpu_custom_call.1} parent=1 // pred_fallthru
      _
    // Predicated region
    $region38: #{tpu_custom_call.1} parent=1 // pred_check
      _
    $region39: #{tpu_custom_call.1} parent=1 // pred_check_branch
      %135 = sbr.rel (0) target = $region41
    $region40: #{tpu_custom_call.1} parent=1 // pred_region
      %s137 = ssub.s32 128, 128
      %138 = vsyncadd [#allocation12], %s137
      %s140 = sshll.u32 [#allocation11], 4
      %s141 = int_to_ptr.vmem [resolvable:$true] %s140
      %143 = dma.vmem_to_hbm [thread:$0]  %s141, 128, %s4, [#allocation12]
    $region41: #{tpu_custom_call.1} parent=1 // pred_fallthru
      _
    // Predicated region
    $region42: #{tpu_custom_call.1} parent=1 // pred_check
      _
    $region43: #{tpu_custom_call.1} parent=1 // pred_check_branch
      %145 = sbr.rel (0) target = $region45
    $region44: #{tpu_custom_call.1} parent=1 // pred_region
      %146 = dma.done [#allocation6], 128
    $region45: #{tpu_custom_call.1} parent=1 // pred_fallthru
      _
    // Predicated region
    $region46: #{tpu_custom_call.1} parent=1 // pred_check
      _
    $region47: #{tpu_custom_call.1} parent=1 // pred_check_branch
      %148 = sbr.rel (0) target = $region49
    $region48: #{tpu_custom_call.1} parent=1 // pred_region
      %149 = dma.done [#allocation12], 128
    $region49: #{tpu_custom_call.1} parent=1 // pred_fallthru
      _
    %150 = vsyncpa [#allocation5], 1
    %151 = vsyncpa [#allocation8], 1
    %152 = vsyncpa [#allocation6], 1
    %153 = vsyncpa [#allocation12], 1

</llo_original>
